<compile_context>
chip_gen: v7x
topology: tpu7x:2x2x1
jax: 0.10.0
libtpu: 0.0.40
codegen_flags: <defaults>
</compile_context>

<pallas_src>
import math

import jax
import jax.numpy as jnp
from jax.experimental import pallas as pl
from jax.experimental.pallas import tpu as pltpu

_LANES = 128
# 4096 rows * 128 lanes * 4 B = 2 MiB per fp32 block; with input+output
# double-buffering that is ~8 MiB of VMEM — safe on v5e/v6e (128 MiB) and
# v7x (64 MiB physical / 32 MiB default scoped).
_MAX_BLOCK_ROWS = 4096


def _copy_kernel(x_ref, o_ref):
    # Identity copy of one lane-dense (block_rows, 128) tile.
    o_ref[...] = x_ref[...]


def _round_up(x, m):
    return ((x + m - 1) // m) * m


def _pallas_physical_copy(x):
    """Physical (HBM read+write) identity copy of `x` via a lane-dense,
    tiled Pallas kernel.  Returns an array with x's shape/dtype."""
    orig_shape = x.shape
    total = math.prod(orig_shape) if orig_shape else 1
    flat = x.reshape(total)

    # View the data as (rows, 128): fully lane-dense, independent of the
    # original feature width.
    rows = pl.cdiv(total, _LANES)
    block_rows = min(_round_up(rows, 8), _MAX_BLOCK_ROWS)   # multiple of 8
    padded_rows = _round_up(rows, block_rows)               # grid divides evenly
    padded_total = padded_rows * _LANES

    if padded_total != total:
        flat = jnp.pad(flat, (0, padded_total - total))
    slab = flat.reshape(padded_rows, _LANES)

    grid = (padded_rows // block_rows,)
    out = pl.pallas_call(
        _copy_kernel,
        out_shape=jax.ShapeDtypeStruct((padded_rows, _LANES), x.dtype),
        grid_spec=pltpu.PrefetchScalarGridSpec(
            num_scalar_prefetch=0,
            grid=grid,
            in_specs=[pl.BlockSpec((block_rows, _LANES), lambda i: (i, 0))],
            out_specs=pl.BlockSpec((block_rows, _LANES), lambda i: (i, 0)),
        ),
        # Independent row tiles -> "parallel" lets v7x shard across its two
        # TensorCores; neutral on single-TC v5e/v6e.
        compiler_params=pltpu.CompilerParams(
            dimension_semantics=("parallel",),
        ),
        # NOTE: input_output_aliases={0: 0} would let XLA write in place when
        # the slab is a donatable temporary; left off to keep eager-mode
        # callers (who may still hold the input) safe.
    )(slab)

    return out.reshape(padded_total)[:total].reshape(orig_shape)


def unflatten(x, type='3d', use_pallas_copy=False):
    """JAX/Pallas equivalent of UnFlatten.forward.

    Default path is a metadata-only reshape (zero HBM traffic — fastest
    possible).  Set use_pallas_copy=True to force a physical copy through
    the tiled Pallas kernel.
    """
    if type == 'cmnist':
        n = x.shape[0]
        assert math.prod(x.shape[1:]) == 2 * 28 * 28, "cmnist expects 1568 features"
        src = _pallas_physical_copy(x) if use_pallas_copy else x
        return src.reshape(n, 2, 28, 28)
    elif type == '2d':
        n, c = x.shape[0], x.shape[1]
        src = _pallas_physical_copy(x) if use_pallas_copy else x
        return src.reshape(n, c, 1, 1)
    # type == '3d': PyTorch forward falls through and returns None.
    # TODO(synk): '3d' branch is undefined in the reference module (returns None).
    return None


if __name__ == "__main__":
    key = jax.random.PRNGKey(0)
    k1, k2 = jax.random.split(key)

    # 'cmnist' path: batch=2, 1568 = 2*28*28 features.
    x_cmnist = jax.random.normal(k1, (2, 1568), dtype=jnp.float32)

    # Default (recommended) path: pure metadata reshape, no kernel launched.
    y_fast = unflatten(x_cmnist, type='cmnist')
    y_fast = jax.block_until_ready(y_fast)
    assert y_fast.shape == (2, 2, 28, 28)
    assert jnp.array_equal(y_fast, x_cmnist.reshape(2, 2, 28, 28))

    # Forced physical copy through the Pallas kernel.
    y_copy = unflatten(x_cmnist, type='cmnist', use_pallas_copy=True)
    y_copy = jax.block_until_ready(y_copy)
    assert y_copy.shape == (2, 2, 28, 28)
    assert jnp.array_equal(y_copy, x_cmnist.reshape(2, 2, 28, 28))

    # '2d' path: batch=2, channels=32.
    x_2d = jax.random.normal(k2, (2, 32), dtype=jnp.float32)
    y_2d_fast = unflatten(x_2d, type='2d')
    y_2d_fast = jax.block_until_ready(y_2d_fast)
    assert y_2d_fast.shape == (2, 32, 1, 1)
    assert jnp.array_equal(y_2d_fast, x_2d.reshape(2, 32, 1, 1))

    y_2d_copy = unflatten(x_2d, type='2d', use_pallas_copy=True)
    y_2d_copy = jax.block_until_ready(y_2d_copy)
    assert y_2d_copy.shape == (2, 32, 1, 1)
    assert jnp.array_equal(y_2d_copy, x_2d.reshape(2, 32, 1, 1))

    # '3d' mirrors the reference module (returns None).
    assert unflatten(x_2d, type='3d') is None

    print("KERNEL_OK")
</pallas_src>

<mosaic_0001>
module attributes {stable_mosaic.version = 11 : i64} {
  func.func @_copy_kernel(%arg0: i32, %arg1: memref<32x128xf32, #tpu.memory_space<vmem>>, %arg2: memref<32x128xf32, #tpu.memory_space<vmem>>) attributes {dimension_semantics = [#tpu.dimension_semantics<parallel>], iteration_bounds = array<i64: 1>, scalar_prefetch = 0 : i64, scratch_operands = 0 : i64, tpu.core_type = #tpu.core_type<tc>, window_params = [{transform_indices = @transform_0, window_bounds = array<i64: 32, 128>}, {transform_indices = @transform_1, window_bounds = array<i64: 32, 128>}]} {
    %c0 = arith.constant 0 : index
    %c0_0 = arith.constant 0 : index
    %0 = vector.load %arg1[%c0, %c0_0] : memref<32x128xf32, #tpu.memory_space<vmem>>, vector<32x128xf32>
    %c0_1 = arith.constant 0 : index
    %c0_2 = arith.constant 0 : index
    %1 = vector.load %arg2[%c0_1, %c0_2] : memref<32x128xf32, #tpu.memory_space<vmem>>, vector<32x128xf32>
    tpu.vector_store %arg2[%c0_1, %c0_2], %0 {strides = array<i32>} : memref<32x128xf32, #tpu.memory_space<vmem>>, vector<32x128xf32>,
    return
  }
  func.func @transform_0(%arg0: i32) -> (i32, i32) {
    %c0_i32 = arith.constant 0 : i32
    %c0_i32_0 = arith.constant 0 : i32
    return %arg0, %c0_i32 : i32, i32
  }
  func.func @transform_1(%arg0: i32) -> (i32, i32) {
    %c0_i32 = arith.constant 0 : i32
    %c0_i32_0 = arith.constant 0 : i32
    return %arg0, %c0_i32 : i32, i32
  }
}

</mosaic_0001>

<llo_original>
// kernel: tpu_custom_call.1
$region0: #{tpu_custom_call.1}
  #allocation0 [shape = 'u32[]', space=smem, size = 0x4, offset = 0x4, fixed_abs, tag = 'smem constant byte address 0x4 - core index']
  #allocation1 [shape = 'u32[144,128]{1,0:T(1,128)}', space=vmem, size = 0x12000, scoped, tag = 'internal scratch']
  %s0 = inlined_call_operand.hbm [shape: f32[32,128], index: 0, kind: input, shape index: {}]
  %s1 = inlined_call_operand.hbm [shape: f32[32,128], index: 1, kind: output, shape index: {}]
  %s2 = sld [smem:[#allocation0]]
  $region18: #{tpu_custom_call.1} parent=0
    _
  %s4 = ssub.s32 1, %s2
  %s5 = scalar_select 0, %s4, %s2
  $region1: #{tpu_custom_call.1} parent=0
    #allocation2 [shape = 'u8[16384]{0}', space=vmem, size = 0x4000, scoped, tag = 'input window, operand 0, single buffered']
    #allocation3 [shape = 's32[1]{0}', space=sflag, size = 0x4, scoped, tag = 'scoped memory for tpu_custom_call.1']
    #allocation4 [shape = 's32[1]{0}', space=sflag, size = 0x4, scoped, tag = 'scoped memory for tpu_custom_call.1']
    #allocation5 [shape = 'u8[16384]{0}', space=vmem, size = 0x4000, scoped, tag = 'output window, operand 0, single buffered']
    %6 = vsyncpa [#allocation3], 0
    %7 = vsyncpa [#allocation4], 0
    // Predicated region
    $region2: #{tpu_custom_call.1} parent=1 // pred_check
      _
    $region3: #{tpu_custom_call.1} parent=1 // pred_check_branch
      %9 = sbr.rel (0) target = $region5
    $region4: #{tpu_custom_call.1} parent=1 // pred_region
      %s11 = ssub.s32 512, 512
      %12 = vsyncadd [#allocation3], %s11
      %s13 = sshll.u32 [#allocation2], 4
      %s14 = int_to_ptr.vmem [resolvable:$true] %s13
      %19 = dma.hbm_to_vmem [thread:$0]  %s0, 512, %s14, [#allocation3], 128, 128, 8
    $region5: #{tpu_custom_call.1} parent=1 // pred_fallthru
      _
    // Predicated region
    $region6: #{tpu_custom_call.1} parent=1 // pred_check
      _
    $region7: #{tpu_custom_call.1} parent=1 // pred_check_branch
      %21 = sbr.rel (0) target = $region9
    $region8: #{tpu_custom_call.1} parent=1 // pred_region
      %22 = dma.done [#allocation3], 512
    $region9: #{tpu_custom_call.1} parent=1 // pred_fallthru
      _
    %v23 = vld [vmem:[#allocation2] sm:$0xff]
    %v24 = vld [vmem:[#allocation2 + $0x8] sm:$0xff]
    %v25 = vld [vmem:[#allocation2 + $0x10] sm:$0xff]
    %v26 = vld [vmem:[#allocation2 + $0x18] sm:$0xff]
    %27 = vst [vmem:[#allocation5] sm:$0xff] %v23
    %28 = vst [vmem:[#allocation5 + $0x8] sm:$0xff] %v24
    %29 = vst [vmem:[#allocation5 + $0x10] sm:$0xff] %v25
    %30 = vst [vmem:[#allocation5 + $0x18] sm:$0xff] %v26
    // Predicated region
    $region10: #{tpu_custom_call.1} parent=1 // pred_check
      _
    $region11: #{tpu_custom_call.1} parent=1 // pred_check_branch
      %32 = sbr.rel (0) target = $region13
    $region12: #{tpu_custom_call.1} parent=1 // pred_region
      %s34 = ssub.s32 512, 512
      %35 = vsyncadd [#allocation4], %s34
      %s36 = sshll.u32 [#allocation5], 4
      %s37 = int_to_ptr.vmem [resolvable:$true] %s36
      %42 = dma.vmem_to_hbm [thread:$0]  %s37, 512, %s1, [#allocation4], 128, 128, 8
    $region13: #{tpu_custom_call.1} parent=1 // pred_fallthru
      _
    // Predicated region
    $region14: #{tpu_custom_call.1} parent=1 // pred_check
      _
    $region15: #{tpu_custom_call.1} parent=1 // pred_check_branch
      %44 = sbr.rel (0) target = $region17
    $region16: #{tpu_custom_call.1} parent=1 // pred_region
      %45 = dma.done [#allocation4], 512
    $region17: #{tpu_custom_call.1} parent=1 // pred_fallthru
      _
    %46 = vsyncpa [#allocation3], 1
    %47 = vsyncpa [#allocation4], 1

</llo_original>
